<compile_context>
chip_gen: v7x
topology: tpu7x:2x2x1
jax: 0.10.0
libtpu: 0.0.40
codegen_flags: <defaults>
</compile_context>

<pallas_src>
import functools

import jax
import jax.numpy as jnp
from jax.experimental import pallas as pl
from jax.experimental.pallas import tpu as pltpu


# --------------------------------------------------------------- kernels ----

def _fms_fused_kernel(x_ref, wT_ref, b_ref, o_ref, *, inv_L):
    """Single fused pass: mean over L -> Linear -> sigmoid -> x*s + s."""
    x = x_ref[...]                                              # (TB, C, L)
    # f32-accumulated time reduction; no explicit full-tile astype (avoids a
    # TB*C*L f32 temporary for sub-f32 inputs). 1/L folded into one scalar mul.
    mean = jnp.sum(x, axis=-1, dtype=jnp.float32) * inv_L       # (TB, C)
    z = jnp.dot(mean, wT_ref[...], preferred_element_type=jnp.float32) + b_ref[...]
    # Scale applied in x's native dtype (tiny deviation from an all-f32
    # reference for bf16/fp8 inputs; exact for f32).
    s = jax.nn.sigmoid(z).astype(x.dtype)[:, :, None]           # (TB, C, 1)
    o_ref[...] = x * s + s


def _fms_reduce_kernel(x_ref, wT_ref, b_ref, s_ref, *, inv_L, L, tl, ragged_l):
    """Long-L fallback, pass 1: accumulate the time sum over L tiles into the
    resident (TB, C, 1) f32 output, then finalize mean -> Linear -> sigmoid."""
    j = pl.program_id(1)

    @pl.when(j == 0)
    def _init():
        s_ref[...] = jnp.zeros_like(s_ref)

    x = x_ref[...]                                              # (TB, C, tl)
    if ragged_l:
        # Mask out-of-range lanes of the ragged last L tile (OOB reads are
        # unspecified and must not pollute the sum).
        lane = jax.lax.broadcasted_iota(jnp.int32, x.shape, dimension=2)
        x = jnp.where(j * tl + lane < L, x, jnp.zeros_like(x))
    s_ref[...] += jnp.sum(x, axis=-1, keepdims=True, dtype=jnp.float32)

    @pl.when(j == pl.num_programs(1) - 1)
    def _finalize():
        acc = s_ref[...]                                        # (TB, C, 1) f32
        mean = acc[:, :, 0] * inv_L                             # (TB, C)
        z = jnp.dot(mean, wT_ref[...],
                    preferred_element_type=jnp.float32) + b_ref[...]
        s_ref[...] = jax.nn.sigmoid(z)[:, :, None]


def _fms_scale_kernel(x_ref, s_ref, o_ref):
    """Long-L fallback, pass 2: broadcast per-(B, C) scale over time."""
    x = x_ref[...]                                              # (TB, C, tl)
    s = s_ref[...].astype(x.dtype)                              # (TB, C, 1)
    o_ref[...] = x * s + s


# ------------------------------------------------------- tiling / budgets ----

_LANE = 128
# Enough steps to keep both v7x TensorCores busy AND give the auto-pipeline
# prefetch/writeback overlap; per-step overhead is ~0.35 us so this is cheap.
_MIN_GRID_STEPS = 8


def _hw_budgets():
    """(per double-buffered-buffer VMEM budget, scoped-VMEM ceiling)."""
    vmem_cap = 64 << 20                       # conservative default: v7x per-TC
    try:
        info = pltpu.get_tpu_info()
        cap = getattr(info, "vmem_capacity_bytes", None)
        if cap:
            vmem_cap = int(cap)
    except Exception:
        pass
    # ~1/10 of VMEM per buffer, clamped: ~6.4 MiB on v7x (64 MiB),
    # ~12.8 MiB on v5e/v6e (128 MiB).
    per_buffer = int(min(max(vmem_cap // 10, 2 << 20), 16 << 20))
    # Scoped-VMEM ceiling with headroom for Mosaic internal scratch:
    # ~40 MiB on v7x, ~80 MiB on v5e/v6e.
    vmem_ceiling = int(vmem_cap * 5 // 8)
    return per_buffer, vmem_ceiling


def _prefer_divisor(n, cap):
    """Largest divisor of n that is <= cap, unless that would more than halve
    the tile; in that case keep cap (ragged last block, writeback is masked
    and rows are independent, so it is correct — just slightly less dense)."""
    cap = max(1, min(n, cap))
    for d in range(cap, 0, -1):
        if n % d == 0:
            return d if 2 * d >= cap else cap
    return cap


def _choose_batch_tile(B, row_bytes, per_buffer):
    """Batch tile: fits the per-buffer VMEM budget, keeps >= min(B, 8) grid
    steps (2 TensorCores + pipeline depth), prefers tiles dividing B."""
    tb_vmem = max(1, per_buffer // max(1, row_bytes))
    target_steps = min(B, _MIN_GRID_STEPS)
    tb_steps = max(1, B // target_steps)
    return _prefer_divisor(B, min(B, tb_vmem, tb_steps))


# ---------------------------------------------------------------- wrapper ----

def fms_block(x, weight, bias, *, _force_l_tile=None):
    """FMSBlock forward.

    x: (B, C, L); weight: (C, C) PyTorch Linear weight (out, in); bias: (C,).
    `_force_l_tile` is test-only: forces the two-pass long-L fallback.
    """
    B, C, L = x.shape
    wT = jnp.asarray(weight).T                  # kernel computes mean @ W^T
    b2 = jnp.asarray(bias).reshape(1, C)
    itemsize = x.dtype.itemsize

    per_buffer, vmem_ceiling = _hw_budgets()
    param_bytes = 2 * (wT.size * wT.dtype.itemsize + b2.size * b2.dtype.itemsize)

    row_bytes = C * L * itemsize
    use_two_pass = (_force_l_tile is not None) or (row_bytes > per_buffer)

    # TODO(synk): for layers with C not a multiple of the sublane pack (e.g.
    # RawNet2's C=20) or very small L (<128 lanes), a (B*C, L) 2-D presentation
    # of the elementwise path would remove sublane/lane padding; not done here.

    if not use_two_pass:
        # -------- fused single pass (default) --------
        tb = _choose_batch_tile(B, row_bytes, per_buffer)
        grid = (pl.cdiv(B, tb),)
        tile_bytes = tb * row_bytes
        # 2 double-buffered input tiles + 2 output tiles + params + slack.
        vmem_limit = int(min(4 * tile_bytes + param_bytes + (4 << 20),
                             vmem_ceiling))
        kernel = functools.partial(_fms_fused_kernel, inv_L=1.0 / L)
        return pl.pallas_call(
            kernel,
            out_shape=jax.ShapeDtypeStruct((B, C, L), x.dtype),
            grid=grid,
            in_specs=[
                # Full C (channel mixing) and full L (lane-dense stores).
                pl.BlockSpec((tb, C, L), lambda i: (i, 0, 0)),
                # Constant index_maps: weight / bias DMA'd once, stay resident.
                pl.BlockSpec((C, C), lambda i: (0, 0)),
                pl.BlockSpec((1, C), lambda i: (0, 0)),
            ],
            out_specs=pl.BlockSpec((tb, C, L), lambda i: (i, 0, 0)),
            compiler_params=pltpu.CompilerParams(
                dimension_semantics=("parallel",),   # shard batch tiles over TCs
                vmem_limit_bytes=vmem_limit,
            ),
        )(x, wT, b2)

    # -------- two-pass, L-tiled fallback for very long time axes --------
    if _force_l_tile is not None:
        tl = int(min(L, _force_l_tile))
    else:
        tl = per_buffer // max(1, C * itemsize)
        tl = max(_LANE, (tl // _LANE) * _LANE)      # lane-dense L tiles
        tl = min(tl, L)
    tb = _choose_batch_tile(B, C * tl * itemsize, per_buffer)
    nb, nl = pl.cdiv(B, tb), pl.cdiv(L, tl)
    ragged_l = (L % tl) != 0

    tile_bytes = tb * C * tl * itemsize
    scale_bytes = tb * C * 4

    # Pass 1: per-(B, C) scales = sigmoid(Linear(mean over L)), f32.
    reduce_kernel = functools.partial(
        _fms_reduce_kernel, inv_L=1.0 / L, L=L, tl=tl, ragged_l=ragged_l)
    scales = pl.pallas_call(
        reduce_kernel,
        out_shape=jax.ShapeDtypeStruct((B, C, 1), jnp.float32),
        grid=(nb, nl),                               # reduction axis (L) last
        in_specs=[
            pl.BlockSpec((tb, C, tl), lambda i, j: (i, 0, j)),
            pl.BlockSpec((C, C), lambda i, j: (0, 0)),
            pl.BlockSpec((1, C), lambda i, j: (0, 0)),
        ],
        out_specs=pl.BlockSpec((tb, C, 1), lambda i, j: (i, 0, 0)),
        compiler_params=pltpu.CompilerParams(
            dimension_semantics=("parallel", "arbitrary"),
            vmem_limit_bytes=int(min(2 * tile_bytes + 2 * scale_bytes
                                     + param_bytes + (4 << 20), vmem_ceiling)),
        ),
    )(x, wT, b2)

    # Pass 2: broadcast-apply x * s + s over the time axis.
    return pl.pallas_call(
        _fms_scale_kernel,
        out_shape=jax.ShapeDtypeStruct((B, C, L), x.dtype),
        grid=(nb, nl),
        in_specs=[
            pl.BlockSpec((tb, C, tl), lambda i, j: (i, 0, j)),
            pl.BlockSpec((tb, C, 1), lambda i, j: (i, 0, 0)),
        ],
        out_specs=pl.BlockSpec((tb, C, tl), lambda i, j: (i, 0, j)),
        compiler_params=pltpu.CompilerParams(
            dimension_semantics=("parallel", "parallel"),
            vmem_limit_bytes=int(min(4 * tile_bytes + 2 * scale_bytes
                                     + (4 << 20), vmem_ceiling)),
        ),
    )(x, scales)


def fms_block_ref(x, weight, bias):
    """Pure-JAX reference mirroring the PyTorch forward."""
    mean = jnp.mean(x, axis=-1)                      # (B, C)
    s = jax.nn.sigmoid(mean @ weight.T + bias)       # (B, C)
    s = s[:, :, None]                                # (B, C, 1)
    return x * s + s


if __name__ == "__main__":
    key = jax.random.PRNGKey(0)
    kx, kw, kb, kx2 = jax.random.split(key, 4)

    # Small shapes consistent with the module: (batch, channels, time).
    B, C, L = 2, 8, 16
    x = jax.random.normal(kx, (B, C, L), dtype=jnp.float32)
    weight = jax.random.normal(kw, (C, C), dtype=jnp.float32) * (1.0 / jnp.sqrt(C))
    bias = jax.random.normal(kb, (C,), dtype=jnp.float32) * 0.1

    out = fms_block(x, weight, bias)
    jax.block_until_ready(out)
    ref = fms_block_ref(x, weight, bias)
    assert out.shape == (B, C, L)
    assert jnp.allclose(out, ref, atol=1e-5, rtol=1e-5), "fused path mismatch"

    # Also exercise the long-L two-pass fallback (forced small L tile with a
    # ragged last L block) so the previously-missing fallback is validated.
    B2, C2, L2 = 4, 8, 608
    x2 = jax.random.normal(kx2, (B2, C2, L2), dtype=jnp.float32)
    out2 = fms_block(x2, weight, bias, _force_l_tile=128)
    jax.block_until_ready(out2)
    ref2 = fms_block_ref(x2, weight, bias)
    assert out2.shape == (B2, C2, L2)
    assert jnp.allclose(out2, ref2, atol=1e-5, rtol=1e-5), "two-pass mismatch"

    print("KERNEL_OK")
</pallas_src>

<mosaic_0001>
module attributes {stable_mosaic.version = 11 : i64} {
  func.func @_fms_fused_kernel(%arg0: i32, %arg1: memref<1x8x16xf32, #tpu.memory_space<vmem>>, %arg2: memref<8x8xf32, #tpu.memory_space<vmem>>, %arg3: memref<1x8xf32, #tpu.memory_space<vmem>>, %arg4: memref<1x8x16xf32, #tpu.memory_space<vmem>>) attributes {dimension_semantics = [#tpu.dimension_semantics<parallel>], iteration_bounds = array<i64: 2>, scalar_prefetch = 0 : i64, scratch_operands = 0 : i64, tpu.core_type = #tpu.core_type<tc>, window_params = [{transform_indices = @transform_0, window_bounds = array<i64: 1, 8, 16>}, {pipeline_mode = #tpu.pipeline_mode<synchronous>, transform_indices = @transform_1, window_bounds = array<i64: 8, 8>}, {pipeline_mode = #tpu.pipeline_mode<synchronous>, transform_indices = @transform_2, window_bounds = array<i64: 1, 8>}, {transform_indices = @transform_3, window_bounds = array<i64: 1, 8, 16>}]} {
    %c0 = arith.constant 0 : index
    %c0_0 = arith.constant 0 : index
    %c0_1 = arith.constant 0 : index
    %0 = vector.load %arg1[%c0, %c0_0, %c0_1] : memref<1x8x16xf32, #tpu.memory_space<vmem>>, vector<1x8x16xf32>
    %cst = arith.constant dense<0.000000e+00> : vector<1x8xf32>
    %1 = vector.multi_reduction <add>, %0, %cst [2] : vector<1x8x16xf32> to vector<1x8xf32>
    %cst_2 = arith.constant 6.250000e-02 : f32
    %2 = vector.broadcast %cst_2 : f32 to vector<1x8xf32>
    %3 = arith.mulf %1, %2 : vector<1x8xf32>
    %c0_3 = arith.constant 0 : index
    %c0_4 = arith.constant 0 : index
    %4 = vector.load %arg2[%c0_3, %c0_4] : memref<8x8xf32, #tpu.memory_space<vmem>>, vector<8x8xf32>
    %cst_5 = arith.constant dense<0.000000e+00> : vector<1x8xf32>
    %5 = tpu.matmul %3, %4, %cst_5 {dimension_numbers = #tpu.dot_dimension_numbers<[1], [0], [0], [1], [0, 0, 1, 1], [], []>} : vector<1x8xf32>, vector<8x8xf32>, vector<1x8xf32> -> vector<1x8xf32>
    %c0_6 = arith.constant 0 : index
    %c0_7 = arith.constant 0 : index
    %6 = vector.load %arg3[%c0_6, %c0_7] : memref<1x8xf32, #tpu.memory_space<vmem>>, vector<1x8xf32>
    %7 = arith.addf %5, %6 : vector<1x8xf32>
    %8 = arith.negf %7 : vector<1x8xf32>
    %9 = math.exp %8 : vector<1x8xf32>
    %cst_8 = arith.constant 1.000000e+00 : f32
    %10 = vector.broadcast %cst_8 : f32 to vector<1x8xf32>
    %11 = arith.addf %10, %9 : vector<1x8xf32>
    %12 = arith.divf %10, %11 : vector<1x8xf32>
    %13 = vector.shape_cast %12 : vector<1x8xf32> to vector<1x8x1xf32>
    %14 = vector.broadcast %13 : vector<1x8x1xf32> to vector<1x8x16xf32>
    %15 = arith.mulf %0, %14 : vector<1x8x16xf32>
    %16 = vector.broadcast %13 : vector<1x8x1xf32> to vector<1x8x16xf32>
    %17 = arith.addf %15, %16 : vector<1x8x16xf32>
    %c0_9 = arith.constant 0 : index
    %c0_10 = arith.constant 0 : index
    %c0_11 = arith.constant 0 : index
    %18 = vector.load %arg4[%c0_9, %c0_10, %c0_11] : memref<1x8x16xf32, #tpu.memory_space<vmem>>, vector<1x8x16xf32>
    tpu.vector_store %arg4[%c0_9, %c0_10, %c0_11], %17 {strides = array<i32>} : memref<1x8x16xf32, #tpu.memory_space<vmem>>, vector<1x8x16xf32>,
    return
  }
  func.func @transform_0(%arg0: i32) -> (i32, i32, i32) {
    %c0_i32 = arith.constant 0 : i32
    %c0_i32_0 = arith.constant 0 : i32
    %c0_i32_1 = arith.constant 0 : i32
    return %arg0, %c0_i32, %c0_i32_0 : i32, i32, i32
  }
  func.func @transform_1(%arg0: i32) -> (i32, i32) {
    %c0_i32 = arith.constant 0 : i32
    %c0_i32_0 = arith.constant 0 : i32
    %c0_i32_1 = arith.constant 0 : i32
    return %c0_i32, %c0_i32_0 : i32, i32
  }
  func.func @transform_2(%arg0: i32) -> (i32, i32) {
    %c0_i32 = arith.constant 0 : i32
    %c0_i32_0 = arith.constant 0 : i32
    %c0_i32_1 = arith.constant 0 : i32
    return %c0_i32, %c0_i32_0 : i32, i32
  }
  func.func @transform_3(%arg0: i32) -> (i32, i32, i32) {
    %c0_i32 = arith.constant 0 : i32
    %c0_i32_0 = arith.constant 0 : i32
    %c0_i32_1 = arith.constant 0 : i32
    return %arg0, %c0_i32, %c0_i32_0 : i32, i32, i32
  }
}

</mosaic_0001>

<llo_original>
// kernel: tpu_custom_call.1
$region0: #{tpu_custom_call.1}
  #allocation0 [shape = 'u32[]', space=smem, size = 0x4, offset = 0x4, fixed_abs, tag = 'smem constant byte address 0x4 - core index']
  #allocation1 [shape = 'u32[144,128]{1,0:T(1,128)}', space=vmem, size = 0x12000, scoped, tag = 'internal scratch']
  %s0 = inlined_call_operand.hbm [shape: f32[2,8,16], index: 0, kind: input, shape index: {}]
  %s1 = inlined_call_operand.hbm [shape: f32[8,8], index: 1, kind: input, shape index: {}]
  %s2 = inlined_call_operand.vmem [shape: f32[1,8], index: 2, kind: input, shape index: {}]
  %s3 = inlined_call_operand.hbm [shape: f32[2,8,16], index: 3, kind: output, shape index: {}]
  %s4 = sld [smem:[#allocation0]]
  $region53: #{tpu_custom_call.1} parent=0
    _
  %s6 = ssub.s32 1, %s4
  %s7 = scalar_select 0, %s6, %s4
  $region1: #{tpu_custom_call.1} parent=0
    #allocation2 [shape = 'u8[8192]{0}', space=vmem, size = 0x2000, scoped, tag = 'input window, operand 0']
    #allocation3 [shape = 's32[2]{0}', space=sflag, size = 0x8, scoped, tag = 'scoped memory for tpu_custom_call.1']
    #allocation4 [shape = 's32[2]{0}', space=sflag, size = 0x8, scoped, tag = 'scoped memory for tpu_custom_call.1']
    #allocation5 [shape = 'u8[4096]{0}', space=vmem, size = 0x1000, scoped, tag = 'input window, operand 1, single buffered']
    #allocation6 [shape = 's32[1]{0}', space=sflag, size = 0x4, scoped, tag = 'scoped memory for tpu_custom_call.1']
    #allocation7 [shape = 'u8[8192]{0}', space=vmem, size = 0x2000, scoped, tag = 'output window, operand 0']
    %8 = vsyncpa [#allocation3], 0
    %s9 = scalar_lea.sflag [#allocation3], 1
    %10 = vsyncpa %s9, 0
    %11 = vsyncpa [#allocation6], 0
    %12 = vsyncpa [#allocation4], 0
    %s13 = scalar_lea.sflag [#allocation4], 1
    %14 = vsyncpa %s13, 0
    loop: start=0, step=1, limit=4
    $region2: #{tpu_custom_call.1} parent=1 // loop_pre_header
      _
    $region3: #{tpu_custom_call.1} parent=1 // loop_header
      %s16 = sphi 0, %s20
      %p17 = scmp.ge.s32.totalorder %s16, 4
      %s26 = sphi 0, %s28
      %s29 = sphi 0, %s26
      %s30 = sphi 0, %s29
      %s46 = sphi 0, %s30
      %s50 = sphi 0, %s50
      %s52 = sphi 0, %s50
      %s53 = sphi 0, %s52
      %s67 = sphi 0, %s53
      %s71 = sphi 0, %s71
      %s73 = sphi 0, %s71
      %s74 = sphi 0, %s73
      %s88 = sphi 0, %s74
      %s94 = sphi 0, %s96
      %s97 = sphi 0, %s94
      %s98 = sphi 0, %s97
      %s114 = sphi 0, %s98
    $region4: #{tpu_custom_call.1} parent=1 // loop_header_branch
      %19 = sbr.rel (%p17) target = $region8
    $region5: #{tpu_custom_call.1} parent=1 // loop_body
      %s21 = ssub.s32 %s16, 1
      %s22 = ssub.s32 %s16, 2
      %s23 = sadd.s32 %s16, 1
      %s24 = ssub.s32 %s16, %s23
      %p25 = scmp.eq.s32.totalorder %s24, 0
      %s27 = sadd.s32 %s26, 1
      %s28 = scalar_select %p25, %s26, %s27
      %p31 = pneg %p25
      %p32 = scmp.eq.s32.totalorder %s16, 1
      %p33 = por %p31, %p32
      %p34 = scmp.ne.s32.totalorder %s26, %s29
      %p35 = scmp.eq.s32.totalorder %s16, 0
      %p36 = por %p34, %p35
      %p37 = scmp.ne.s32.totalorder %s26, %s29
      %p38 = scmp.eq.s32.totalorder %s21, 1
      %p39 = por %p37, %p38
      %p40 = scmp.ne.s32.totalorder %s29, %s30
      %p41 = scmp.eq.s32.totalorder %s21, 0
      %p42 = por %p40, %p41
      %p43 = scmp.ne.s32.totalorder %s29, %s30
      %p44 = scmp.eq.s32.totalorder %s22, 1
      %p45 = por %p43, %p44
      %p47 = scmp.ne.s32.totalorder %s30, %s46
      %p48 = scmp.eq.s32.totalorder %s22, 0
      %p49 = por %p47, %p48
      %s51 = sadd.s32 %s50, 1
      %p54 = scmp.eq.s32.totalorder %s16, 1
      %p55 = scmp.ne.s32.totalorder %s50, %s52
      %p56 = scmp.eq.s32.totalorder %s16, 0
      %p57 = por %p55, %p56
      %p58 = scmp.ne.s32.totalorder %s50, %s52
      %p59 = scmp.eq.s32.totalorder %s21, 1
      %p60 = por %p58, %p59
      %p61 = scmp.ne.s32.totalorder %s52, %s53
      %p62 = scmp.eq.s32.totalorder %s21, 0
      %p63 = por %p61, %p62
      %p64 = scmp.ne.s32.totalorder %s52, %s53
      %p65 = scmp.eq.s32.totalorder %s22, 1
      %p66 = por %p64, %p65
      %p68 = scmp.ne.s32.totalorder %s53, %s67
      %p69 = scmp.eq.s32.totalorder %s22, 0
      %p70 = por %p68, %p69
      %s72 = sadd.s32 %s71, 1
      %p75 = scmp.eq.s32.totalorder %s16, 1
      %p76 = scmp.ne.s32.totalorder %s71, %s73
      %p77 = scmp.eq.s32.totalorder %s16, 0
      %p78 = por %p76, %p77
      %p79 = scmp.ne.s32.totalorder %s71, %s73
      %p80 = scmp.eq.s32.totalorder %s21, 1
      %p81 = por %p79, %p80
      %p82 = scmp.ne.s32.totalorder %s73, %s74
      %p83 = scmp.eq.s32.totalorder %s21, 0
      %p84 = por %p82, %p83
      %p85 = scmp.ne.s32.totalorder %s73, %s74
      %p86 = scmp.eq.s32.totalorder %s22, 1
      %p87 = por %p85, %p86
      %p89 = scmp.ne.s32.totalorder %s74, %s88
      %p90 = scmp.eq.s32.totalorder %s22, 0
      %p91 = por %p89, %p90
      %s92 = ssub.s32 %s16, %s23
      %p93 = scmp.eq.s32.totalorder %s92, 0
      %s95 = sadd.s32 %s94, 1
      %s96 = scalar_select %p93, %s94, %s95
      %p99 = pneg %p93
      %p100 = scmp.eq.s32.totalorder %s16, 1
      %p101 = por %p99, %p100
      %p102 = scmp.ne.s32.totalorder %s94, %s97
      %p103 = scmp.eq.s32.totalorder %s16, 0
      %p104 = por %p102, %p103
      %p105 = scmp.ne.s32.totalorder %s94, %s97
      %p106 = scmp.eq.s32.totalorder %s21, 1
      %p107 = por %p105, %p106
      %p108 = scmp.ne.s32.totalorder %s97, %s98
      %p109 = scmp.eq.s32.totalorder %s21, 0
      %p110 = por %p108, %p109
      %p111 = scmp.ne.s32.totalorder %s97, %s98
      %p112 = scmp.eq.s32.totalorder %s22, 1
      %p113 = por %p111, %p112
      %p115 = scmp.ne.s32.totalorder %s98, %s114
      %p116 = scmp.eq.s32.totalorder %s22, 0
      %p117 = por %p115, %p116
      %p118 = scmp.le.s32.totalorder 1, %s16
      %p119 = scmp.lt.s32.totalorder %s16, 3
      %p120 = pnand %p118, %p119
      %p121 = pneg %p120
      // Predicated region
      $region9: #{tpu_custom_call.1} parent=5 // pred_check
        _
      $region10: #{tpu_custom_call.1} parent=5 // pred_check_branch
        %123 = sbr.rel (%p120) target = $region12
      $region11: #{tpu_custom_call.1} parent=5 // pred_region
        %s124 = ssub.s32 %s16, 1
        // Predicated region
        $region13: #{tpu_custom_call.1} parent=11 // pred_check
          %p125 = pneg %p63
        $region14: #{tpu_custom_call.1} parent=11 // pred_check_branch
          %127 = sbr.rel (%p125) target = $region16
        $region15: #{tpu_custom_call.1} parent=11 // pred_region
          %s129 = ssub.s32 128, 128
          %130 = vsyncadd [#allocation6], %s129
          %s132 = sshll.u32 [#allocation5], 4
          %s133 = int_to_ptr.vmem [resolvable:$true] %s132
          %135 = dma.hbm_to_vmem [thread:$0]  %s1, 128, %s133, [#allocation6]
        $region16: #{tpu_custom_call.1} parent=11 // pred_fallthru
          _
        // Predicated region
        $region17: #{tpu_custom_call.1} parent=11 // pred_check
          %p136 = pneg %p84
        $region18: #{tpu_custom_call.1} parent=11 // pred_check_branch
          %138 = sbr.rel (%p136) target = $region20
        $region19: #{tpu_custom_call.1} parent=11 // pred_region
          _
        $region20: #{tpu_custom_call.1} parent=11 // pred_fallthru
          _
      $region12: #{tpu_custom_call.1} parent=5 // pred_fallthru
        _
      %p139 = scmp.lt.s32.totalorder %s16, 2
      // Predicated region
      $region21: #{tpu_custom_call.1} parent=5 // pred_check
        %p140 = pneg %p139
      $region22: #{tpu_custom_call.1} parent=5 // pred_check_branch
        %142 = sbr.rel (%p140) target = $region24
      $region23: #{tpu_custom_call.1} parent=5 // pred_region
        // Predicated region
        $region25: #{tpu_custom_call.1} parent=23 // pred_check
          %p143 = pneg %p36
        $region26: #{tpu_custom_call.1} parent=23 // pred_check_branch
          %145 = sbr.rel (%p143) target = $region28
        $region27: #{tpu_custom_call.1} parent=23 // pred_region
          %s146 = sand.u32 %s26, 1
          %s147 = scalar_lea.sflag [#allocation3], %s146
          %s148 = sand.u32 %s26, 1
          %s149 = smul.addr %s148, 8
          %s150 = scalar_lea.vmem [#allocation2], %s149
          %s152 = ssub.s32 128, 128
          %153 = vsyncadd %s147, %s152
          %s154 = smul.addr %s16, 128
          %s155 = scalar_lea.hbm %s0, %s154
          %s157 = sshll.u32 %s150, 4
          %s158 = int_to_ptr.vmem [resolvable:$true] %s157
          %160 = dma.hbm_to_vmem [thread:$0]  %s155, 128, %s158, %s147
        $region28: #{tpu_custom_call.1} parent=23 // pred_fallthru
          _
      $region24: #{tpu_custom_call.1} parent=5 // pred_fallthru
        _
      %p161 = scmp.le.s32.totalorder 1, %s16
      %p162 = scmp.lt.s32.totalorder %s16, 3
      %p163 = pnand %p161, %p162
      %p164 = pneg %p163
      // Predicated region
      $region29: #{tpu_custom_call.1} parent=5 // pred_check
        _
      $region30: #{tpu_custom_call.1} parent=5 // pred_check_branch
        %166 = sbr.rel (%p163) target = $region32
      $region31: #{tpu_custom_call.1} parent=5 // pred_region
        %s167 = ssub.s32 %s16, 1
        %s168 = sand.u32 %s29, 1
        %s169 = scalar_lea.sflag [#allocation3], %s168
        %s170 = sand.u32 %s29, 1
        %s171 = smul.addr %s170, 8
        %s172 = scalar_lea.vmem [#allocation2], %s171
        // Predicated region
        $region33: #{tpu_custom_call.1} parent=31 // pred_check
          %p173 = pneg %p42
        $region34: #{tpu_custom_call.1} parent=31 // pred_check_branch
          %175 = sbr.rel (%p173) target = $region36
        $region35: #{tpu_custom_call.1} parent=31 // pred_region
          %176 = dma.done %s169, 128
        $region36: #{tpu_custom_call.1} parent=31 // pred_fallthru
          _
        // Predicated region
        $region37: #{tpu_custom_call.1} parent=31 // pred_check
          %p177 = pneg %p63
        $region38: #{tpu_custom_call.1} parent=31 // pred_check_branch
          %179 = sbr.rel (%p177) target = $region40
        $region39: #{tpu_custom_call.1} parent=31 // pred_region
          %180 = dma.done [#allocation6], 128
        $region40: #{tpu_custom_call.1} parent=31 // pred_fallthru
          _
        %s181 = sand.u32 %s29, 1
        %s182 = scalar_lea.sflag [#allocation3], %s181
        %s183 = sand.u32 %s29, 1
        %s184 = smul.addr %s183, 8
        %s185 = scalar_lea.vmem [#allocation2], %s184
        %p186 = pneg %p42
        %p187 = pneg %p39
        %p188 = pneg %p63
        %p189 = pneg %p60
        %p190 = pneg %p84
        %p191 = pneg %p81
        %p192 = pneg %p110
        %p193 = pneg %p107
        %s194 = sand.u32 %s97, 1
        %s195 = scalar_lea.sflag [#allocation4], %s194
        %s196 = sand.u32 %s97, 1
        %s197 = smul.addr %s196, 8
        %s198 = scalar_lea.vmem [#allocation7], %s197
        %v199 = vld [vmem:[%s172] sm:$0xff]
        %vm200 = vcmask 130048
        %v201 = vsel %vm200, %v199, 0.0
        %202 = vadd.xlane.f32.xlu0 %v201
        %v203 = vpop.xlane.xlu0 %202
        %v204 = vmul.f32 %v203, 0.0625
        %v205 = vld [vmem:[#allocation5] sm:$0xff]
        %v206 = vld [vmem:[%s2] sm:$0x1]
        %v208 = vlaneseq
        %v209 = vand.u32 %v208, 127
        %v210 = vlaneseq
        %v211 = vshrl.u32 %v210, 7
        %v212 = vsub.s32 %v209, %v211
        %v213 = vrot.slane %v204, %v212
        %vm214 = vcmask 64512
        %v215 = vsel %vm214, %v213, 0
        %217 = vmatprep.subr.mxu0 0.0
        %218 = vmatpush1.msra.mxu0 %v205
        %219 = vmatprep.subr.mxu0 0.0
        %220 = vmatpush1.msra.mxu0 0.0
        %221 = vmatprep.subr.mxu0 0.0
        %222 = vmatpush1.msra.mxu0 0.0
        %223 = vmatprep.subr.mxu0 0.0
        %224 = vmatpush1.msra.mxu0 0.0
        %225 = vmatprep.subr.mxu0 0.0
        %226 = vmatpush1.msra.mxu0 0.0
        %227 = vmatprep.subr.mxu0 0.0
        %228 = vmatpush1.msra.mxu0 0.0
        %229 = vmatprep.subr.mxu0 0.0
        %230 = vmatpush1.msra.mxu0 0.0
        %231 = vmatprep.subr.mxu0 0.0
        %232 = vmatpush1.msra.mxu0 0.0
        %233 = vmatprep.subr.mxu0 0.0
        %234 = vmatpush1.msra.mxu0 0.0
        %235 = vmatprep.subr.mxu0 0.0
        %236 = vmatpush1.msra.mxu0 0.0
        %237 = vmatprep.subr.mxu0 0.0
        %238 = vmatpush1.msra.mxu0 0.0
        %239 = vmatprep.subr.mxu0 0.0
        %240 = vmatpush1.msra.mxu0 0.0
        %241 = vmatprep.subr.mxu0 0.0
        %242 = vmatpush1.msra.mxu0 0.0
        %243 = vmatprep.subr.mxu0 0.0
        %244 = vmatpush1.msra.mxu0 0.0
        %245 = vmatprep.subr.mxu0 0.0
        %246 = vmatpush1.msra.mxu0 0.0
        %247 = vmatprep.subr.mxu0 0.0
        %248 = vmatpush1.msra.mxu0 0.0
        %249 = vmatprep.subr.mxu0 0.0
        %250 = vmatpush1.msra.mxu0 0.0
        %251 = vmatprep.subr.mxu0 0.0
        %252 = vmatpush1.msra.mxu0 0.0
        %253 = vmatprep.subr.mxu0 0.0
        %254 = vmatpush1.msra.mxu0 0.0
        %255 = vmatprep.subr.mxu0 0.0
        %256 = vmatpush1.msra.mxu0 0.0
        %257 = vmatprep.subr.mxu0 0.0
        %258 = vmatpush1.msra.mxu0 0.0
        %259 = vmatprep.subr.mxu0 0.0
        %260 = vmatpush1.msra.mxu0 0.0
        %261 = vmatprep.subr.mxu0 0.0
        %262 = vmatpush1.msra.mxu0 0.0
        %263 = vmatprep.subr.mxu0 0.0
        %264 = vmatpush1.msra.mxu0 0.0
        %265 = vmatprep.subr.mxu0 0.0
        %266 = vmatpush1.msra.mxu0 0.0
        %267 = vmatprep.subr.mxu0 0.0
        %268 = vmatpush1.msra.mxu0 0.0
        %269 = vmatprep.subr.mxu0 0.0
        %270 = vmatpush1.msra.mxu0 0.0
        %271 = vmatprep.subr.mxu0 0.0
        %272 = vmatpush1.msra.mxu0 0.0
        %273 = vmatprep.subr.mxu0 0.0
        %274 = vmatpush1.msra.mxu0 0.0
        %275 = vmatprep.subr.mxu0 0.0
        %276 = vmatpush1.msra.mxu0 0.0
        %277 = vmatprep.subr.mxu0 0.0
        %278 = vmatpush1.msra.mxu0 0.0
        %279 = vmatprep.subr.mxu0 0.0
        %280 = vmatpush1.msra.mxu0 0.0
        %281 = vmatprep.mubr.f32.mxu0 0.0
        %282 = vmatmul.mubr.f32.gmra.mrb[0].mxu0 %v215
        %v283 = vpop.f32.mrb[0].mxu0
        %v284 = vadd.f32 %v206, %v283
        %v285 = vpop.f32.mrb[0].mxu0
        %286 = vdwg.mxu0
        %v287 = vxor.u32 %v284, 2147483648
        %v288 = vmul.f32 %v287, 1.442695
        %v289 = vpow.pop %v288
        %v290 = vadd.f32 %v289, 1.0
        %v291 = vrcp.pop %v290
        %v292 = vmul.f32 1.0, %v291
        %v293 = vlaneseq
        %v294 = vshrl.u32 %v293, 7
        %v295 = vsub.s32 0, %v294
        %v296 = vrot.slane %v292, %v295
        %298 = vbcast.lane.b32.xlu0 %v296, 256
        %v299 = vpop.permute.xlu0 %298
        %v300 = vmul.f32 %v199, %v299
        %v301 = vadd.f32 %v300, %v299
        %302 = vst.msk [vmem:[%s198] sm:$0xff] %vm200, %v301
        %s303 = sand.u32 %s97, 1
        %s304 = scalar_lea.sflag [#allocation4], %s303
        %s305 = sand.u32 %s97, 1
        %s306 = smul.addr %s305, 8
        %s307 = scalar_lea.vmem [#allocation7], %s306
        // Predicated region
        $region41: #{tpu_custom_call.1} parent=31 // pred_check
          %p308 = pneg %p107
        $region42: #{tpu_custom_call.1} parent=31 // pred_check_branch
          %310 = sbr.rel (%p308) target = $region44
        $region43: #{tpu_custom_call.1} parent=31 // pred_region
          %s312 = ssub.s32 128, 128
          %313 = vsyncadd %s304, %s312
          %s314 = smul.addr %s21, 128
          %s315 = scalar_lea.hbm %s3, %s314
          %s317 = sshll.u32 %s307, 4
          %s318 = int_to_ptr.vmem [resolvable:$true] %s317
          %320 = dma.vmem_to_hbm [thread:$0]  %s318, 128, %s315, %s304
        $region44: #{tpu_custom_call.1} parent=31 // pred_fallthru
          _
      $region32: #{tpu_custom_call.1} parent=5 // pred_fallthru
        _
      %p321 = scmp.le.s32.totalorder 2, %s16
      // Predicated region
      $region45: #{tpu_custom_call.1} parent=5 // pred_check
        %p322 = pneg %p321
      $region46: #{tpu_custom_call.1} parent=5 // pred_check_branch
        %324 = sbr.rel (%p322) target = $region48
      $region47: #{tpu_custom_call.1} parent=5 // pred_region
        %s325 = ssub.s32 %s16, 2
        // Predicated region
        $region49: #{tpu_custom_call.1} parent=47 // pred_check
          %p326 = pneg %p113
        $region50: #{tpu_custom_call.1} parent=47 // pred_check_branch
          %328 = sbr.rel (%p326) target = $region52
        $region51: #{tpu_custom_call.1} parent=47 // pred_region
          %s329 = sand.u32 %s98, 1
          %s330 = scalar_lea.sflag [#allocation4], %s329
          %s331 = sand.u32 %s98, 1
          %s332 = smul.addr %s331, 8
          %s333 = scalar_lea.vmem [#allocation7], %s332
          %334 = dma.done %s330, 128
        $region52: #{tpu_custom_call.1} parent=47 // pred_fallthru
          _
      $region48: #{tpu_custom_call.1} parent=5 // pred_fallthru
        _
    $region6: #{tpu_custom_call.1} parent=1 // loop_footer
      %s20 = sadd.s32 1, %s16
    $region7: #{tpu_custom_call.1} parent=1 // loop_footer_branch
      %15 = sbr.rel target = $region3
    $region8: #{tpu_custom_call.1} parent=1 // loop_exit
      _
    %335 = vsyncpa [#allocation3], 1
    %s336 = scalar_lea.sflag [#allocation3], 1
    %337 = vsyncpa %s336, 1
    %338 = vsyncpa [#allocation6], 1
    %339 = vsyncpa [#allocation4], 1
    %s340 = scalar_lea.sflag [#allocation4], 1
    %341 = vsyncpa %s340, 1

</llo_original>
